<compile_context>
chip_gen: v7x
topology: tpu7x:2x2x1
jax: 0.10.0
libtpu: 0.0.40
codegen_flags: <defaults>
</compile_context>

<pallas_src>
import jax
import jax.numpy as jnp
from jax.experimental import pallas as pl
from jax.experimental.pallas import tpu as pltpu

N_INPUT = 72
N_HIDDEN = 100
N_OUTPUT = 24
N_LAST = 24          # forward() returns the last 24 of the T-1 per-timestep outputs
LANE = 128           # TPU lane width; hidden dims padded to this
TM_MAX = 1024        # large row tiles amortize per-step overhead; VMEM use stays ~few MiB
SPLIT_THRESHOLD = 64 # above this, force >=2 grid steps so v7x uses both TensorCores


def _round_up(x, m):
    return ((x + m - 1) // m) * m


def mlp_kernel(x_ref, w1_ref, b1_ref, w2_ref, b2_ref, w3_ref, b3_ref,
               w4_ref, b4_ref, o_ref):
    # bf16 operands into every MXU dot; f32 accumulation + bias/ReLU on the VPU.
    x = x_ref[...]                                    # (tm, 72) bf16
    h = jnp.dot(x, w1_ref[...], preferred_element_type=jnp.float32) + b1_ref[...]
    h = jnp.maximum(h, 0.0)
    h = jnp.dot(h.astype(jnp.bfloat16), w2_ref[...],
                preferred_element_type=jnp.float32) + b2_ref[...]
    h = jnp.maximum(h, 0.0)
    h = jnp.dot(h.astype(jnp.bfloat16), w3_ref[...],
                preferred_element_type=jnp.float32) + b3_ref[...]
    h = jnp.maximum(h, 0.0)
    o_ref[...] = jnp.dot(h.astype(jnp.bfloat16), w4_ref[...],
                         preferred_element_type=jnp.float32) + b4_ref[...]


def pad_params(params):
    """Zero-pad hidden dims to lane width (128) and cast weights to bf16.

    Padded rows/cols are exactly zero, so padded lanes stay zero through the whole
    bias+ReLU chain and cannot leak into real outputs.  Biases stay f32 (VPU work is f32).
    """
    w1, b1, w2, b2, w3, b3, w4, b4 = params

    def pad2(a, r, c):
        return jnp.pad(a, ((0, r - a.shape[0]), (0, c - a.shape[1])))

    return (
        pad2(w1, N_INPUT, LANE).astype(jnp.bfloat16),  pad2(b1, 1, LANE),
        pad2(w2, LANE, LANE).astype(jnp.bfloat16),     pad2(b2, 1, LANE),
        pad2(w3, LANE, LANE).astype(jnp.bfloat16),     pad2(b3, 1, LANE),
        pad2(w4, LANE, N_OUTPUT).astype(jnp.bfloat16), b4,   # output dim stays 24
    )


def mlp_rows(x_rows, padded_params):
    """Apply the 4-layer MLP to each row: (R, 72) bf16 -> (R, 24) f32."""
    w1, b1, w2, b2, w3, b3, w4, b4 = padded_params
    R = x_rows.shape[0]

    if R > SPLIT_THRESHOLD:
        # >= 2 grid steps so v7x's two TensorCores both get work on the "parallel" axis;
        # tiles stay large (up to 1024 rows) for v6e/v5e efficiency.
        tm = min(TM_MAX, _round_up(pl.cdiv(R, 2), 8))
    else:
        tm = _round_up(R, 8)
    grid = (pl.cdiv(R, tm),)

    def resident(shape):
        # Block index never changes -> fetched once, stays resident in VMEM.
        return pl.BlockSpec(shape, lambda i: (0, 0))

    flops = 2 * R * (N_INPUT * LANE + 2 * LANE * LANE + LANE * N_OUTPUT)
    bytes_accessed = (
        R * N_INPUT * 2                                           # bf16 activations in
        + R * N_OUTPUT * 4                                        # f32 outputs
        + (N_INPUT * LANE + 2 * LANE * LANE + LANE * N_OUTPUT) * 2  # bf16 weights
        + (3 * LANE + N_OUTPUT) * 4                               # f32 biases
    )

    return pl.pallas_call(
        mlp_kernel,
        out_shape=jax.ShapeDtypeStruct((R, N_OUTPUT), jnp.float32),
        grid=grid,
        in_specs=[
            pl.BlockSpec((tm, N_INPUT), lambda i: (i, 0)),
            resident(w1.shape), resident(b1.shape),
            resident(w2.shape), resident(b2.shape),
            resident(w3.shape), resident(b3.shape),
            resident(w4.shape), resident(b4.shape),
        ],
        # 24 == full last dim of the output array, so a (tm, 24) block is legal;
        # no lane-padded output + no post-kernel slice HLO.
        out_specs=pl.BlockSpec((tm, N_OUTPUT), lambda i: (i, 0)),
        compiler_params=pltpu.CompilerParams(
            dimension_semantics=("parallel",),
            vmem_limit_bytes=32 * 1024 * 1024,
            # Let XLA fuse the slice/reshape/bf16-cast producer of x into the call.
            allow_input_fusion=[True] + [False] * 8,
        ),
        cost_estimate=pl.CostEstimate(
            flops=flops, transcendentals=0, bytes_accessed=bytes_accessed),
    )(x_rows, w1, b1, w2, b2, w3, b3, w4, b4)


@jax.jit
def basic_mlp_forward(u, padded_params):
    """Matches BasicMLP.forward, but only computes the timesteps that survive the final
    [:, -24:, :] slice (rows u[:, T-1-n_keep : T-1, :])."""
    B, T, F = u.shape
    assert T >= 2, "need at least 2 timesteps"
    n_keep = min(N_LAST, T - 1)
    start = (T - 1) - n_keep
    # slice + reshape + bf16 cast fuse into the pallas_call (allow_input_fusion).
    x = u[:, start:T - 1, :].reshape(B * n_keep, F).astype(jnp.bfloat16)
    y = mlp_rows(x, padded_params)
    return y.reshape(B, n_keep, N_OUTPUT)


def init_params(key):
    """Deterministic init mimicking PyTorch Linear default U(-1/sqrt(fan_in), +)."""
    sizes = [(N_INPUT, N_HIDDEN), (N_HIDDEN, N_HIDDEN),
             (N_HIDDEN, N_HIDDEN), (N_HIDDEN, N_OUTPUT)]
    params = []
    for (fan_in, fan_out) in sizes:
        key, kw, kb = jax.random.split(key, 3)
        bound = 1.0 / jnp.sqrt(fan_in)
        w = jax.random.uniform(kw, (fan_in, fan_out), jnp.float32, -bound, bound)
        b = jax.random.uniform(kb, (1, fan_out), jnp.float32, -bound, bound)
        params += [w, b]
    return tuple(params)


def reference_forward(u, params):
    """Plain-JAX f32 reference (unpadded params, full T-1 timesteps then slice)."""
    w1, b1, w2, b2, w3, b3, w4, b4 = params
    B, T, F = u.shape
    x = u[:, : T - 1, :].reshape(B * (T - 1), F)
    h = jnp.maximum(x @ w1 + b1, 0.0)
    h = jnp.maximum(h @ w2 + b2, 0.0)
    h = jnp.maximum(h @ w3 + b3, 0.0)
    y = (h @ w4 + b4).reshape(B, T - 1, N_OUTPUT)
    return y[:, -N_LAST:, :]


if __name__ == "__main__":
    key = jax.random.PRNGKey(0)
    k_u, k_p = jax.random.split(key)

    B, T, F = 2, 32, N_INPUT  # small shapes: output is (2, 24, 24)
    u = jax.random.normal(k_u, (B, T, F), dtype=jnp.float32)
    params = init_params(k_p)
    padded = pad_params(params)

    out = basic_mlp_forward(u, padded)
    out = jax.block_until_ready(out)

    ref = reference_forward(u, params)
    assert out.shape == (B, N_LAST, N_OUTPUT), out.shape
    # bf16 MXU inputs (f32 accumulation) -> compare against the f32 reference with an
    # application-level tolerance instead of tight f32 tolerance.
    max_err = float(jnp.max(jnp.abs(out - ref)))
    assert jnp.allclose(out, ref, atol=3e-2, rtol=3e-2), f"mismatch vs reference, max abs err {max_err}"

    print("KERNEL_OK")
</pallas_src>

<mosaic_0001>
module attributes {stable_mosaic.version = 11 : i64} {
  func.func @mlp_kernel(%arg0: i32, %arg1: memref<48x72xbf16, #tpu.memory_space<vmem>>, %arg2: memref<72x128xbf16, #tpu.memory_space<vmem>>, %arg3: memref<1x128xf32, #tpu.memory_space<vmem>>, %arg4: memref<128x128xbf16, #tpu.memory_space<vmem>>, %arg5: memref<1x128xf32, #tpu.memory_space<vmem>>, %arg6: memref<128x128xbf16, #tpu.memory_space<vmem>>, %arg7: memref<1x128xf32, #tpu.memory_space<vmem>>, %arg8: memref<128x24xbf16, #tpu.memory_space<vmem>>, %arg9: memref<1x24xf32, #tpu.memory_space<vmem>>, %arg10: memref<48x24xf32, #tpu.memory_space<vmem>>) attributes {dimension_semantics = [#tpu.dimension_semantics<parallel>], iteration_bounds = array<i64: 1>, scalar_prefetch = 0 : i64, scratch_operands = 0 : i64, tpu.core_type = #tpu.core_type<tc>, window_params = [{transform_indices = @transform_0, window_bounds = array<i64: 48, 72>}, {pipeline_mode = #tpu.pipeline_mode<synchronous>, transform_indices = @transform_1, window_bounds = array<i64: 72, 128>}, {pipeline_mode = #tpu.pipeline_mode<synchronous>, transform_indices = @transform_2, window_bounds = array<i64: 1, 128>}, {pipeline_mode = #tpu.pipeline_mode<synchronous>, transform_indices = @transform_3, window_bounds = array<i64: 128, 128>}, {pipeline_mode = #tpu.pipeline_mode<synchronous>, transform_indices = @transform_4, window_bounds = array<i64: 1, 128>}, {pipeline_mode = #tpu.pipeline_mode<synchronous>, transform_indices = @transform_5, window_bounds = array<i64: 128, 128>}, {pipeline_mode = #tpu.pipeline_mode<synchronous>, transform_indices = @transform_6, window_bounds = array<i64: 1, 128>}, {pipeline_mode = #tpu.pipeline_mode<synchronous>, transform_indices = @transform_7, window_bounds = array<i64: 128, 24>}, {pipeline_mode = #tpu.pipeline_mode<synchronous>, transform_indices = @transform_8, window_bounds = array<i64: 1, 24>}, {transform_indices = @transform_9, window_bounds = array<i64: 48, 24>}]} {
    %c0 = arith.constant 0 : index
    %c0_0 = arith.constant 0 : index
    %0 = vector.load %arg1[%c0, %c0_0] : memref<48x72xbf16, #tpu.memory_space<vmem>>, vector<48x72xbf16>
    %c0_1 = arith.constant 0 : index
    %c0_2 = arith.constant 0 : index
    %1 = vector.load %arg2[%c0_1, %c0_2] : memref<72x128xbf16, #tpu.memory_space<vmem>>, vector<72x128xbf16>
    %cst = arith.constant dense<0.000000e+00> : vector<48x128xf32>
    %2 = tpu.matmul %0, %1, %cst {dimension_numbers = #tpu.dot_dimension_numbers<[1], [0], [0], [1], [0, 0, 1, 1], [], []>} : vector<48x72xbf16>, vector<72x128xbf16>, vector<48x128xf32> -> vector<48x128xf32>
    %c0_3 = arith.constant 0 : index
    %c0_4 = arith.constant 0 : index
    %3 = vector.load %arg3[%c0_3, %c0_4] : memref<1x128xf32, #tpu.memory_space<vmem>>, vector<1x128xf32>
    %4 = vector.broadcast %3 : vector<1x128xf32> to vector<48x128xf32>
    %5 = arith.addf %2, %4 : vector<48x128xf32>
    %cst_5 = arith.constant 0.000000e+00 : f32
    %6 = vector.broadcast %cst_5 : f32 to vector<48x128xf32>
    %7 = arith.maximumf %5, %6 : vector<48x128xf32>
    %8 = arith.truncf %7 : vector<48x128xf32> to vector<48x128xbf16>
    %c0_6 = arith.constant 0 : index
    %c0_7 = arith.constant 0 : index
    %9 = vector.load %arg4[%c0_6, %c0_7] : memref<128x128xbf16, #tpu.memory_space<vmem>>, vector<128x128xbf16>
    %cst_8 = arith.constant dense<0.000000e+00> : vector<48x128xf32>
    %10 = tpu.matmul %8, %9, %cst_8 {dimension_numbers = #tpu.dot_dimension_numbers<[1], [0], [0], [1], [0, 0, 1, 1], [], []>} : vector<48x128xbf16>, vector<128x128xbf16>, vector<48x128xf32> -> vector<48x128xf32>
    %c0_9 = arith.constant 0 : index
    %c0_10 = arith.constant 0 : index
    %11 = vector.load %arg5[%c0_9, %c0_10] : memref<1x128xf32, #tpu.memory_space<vmem>>, vector<1x128xf32>
    %12 = vector.broadcast %11 : vector<1x128xf32> to vector<48x128xf32>
    %13 = arith.addf %10, %12 : vector<48x128xf32>
    %cst_11 = arith.constant 0.000000e+00 : f32
    %14 = vector.broadcast %cst_11 : f32 to vector<48x128xf32>
    %15 = arith.maximumf %13, %14 : vector<48x128xf32>
    %16 = arith.truncf %15 : vector<48x128xf32> to vector<48x128xbf16>
    %c0_12 = arith.constant 0 : index
    %c0_13 = arith.constant 0 : index
    %17 = vector.load %arg6[%c0_12, %c0_13] : memref<128x128xbf16, #tpu.memory_space<vmem>>, vector<128x128xbf16>
    %cst_14 = arith.constant dense<0.000000e+00> : vector<48x128xf32>
    %18 = tpu.matmul %16, %17, %cst_14 {dimension_numbers = #tpu.dot_dimension_numbers<[1], [0], [0], [1], [0, 0, 1, 1], [], []>} : vector<48x128xbf16>, vector<128x128xbf16>, vector<48x128xf32> -> vector<48x128xf32>
    %c0_15 = arith.constant 0 : index
    %c0_16 = arith.constant 0 : index
    %19 = vector.load %arg7[%c0_15, %c0_16] : memref<1x128xf32, #tpu.memory_space<vmem>>, vector<1x128xf32>
    %20 = vector.broadcast %19 : vector<1x128xf32> to vector<48x128xf32>
    %21 = arith.addf %18, %20 : vector<48x128xf32>
    %cst_17 = arith.constant 0.000000e+00 : f32
    %22 = vector.broadcast %cst_17 : f32 to vector<48x128xf32>
    %23 = arith.maximumf %21, %22 : vector<48x128xf32>
    %24 = arith.truncf %23 : vector<48x128xf32> to vector<48x128xbf16>
    %c0_18 = arith.constant 0 : index
    %c0_19 = arith.constant 0 : index
    %25 = vector.load %arg8[%c0_18, %c0_19] : memref<128x24xbf16, #tpu.memory_space<vmem>>, vector<128x24xbf16>
    %cst_20 = arith.constant dense<0.000000e+00> : vector<48x24xf32>
    %26 = tpu.matmul %24, %25, %cst_20 {dimension_numbers = #tpu.dot_dimension_numbers<[1], [0], [0], [1], [0, 0, 1, 1], [], []>} : vector<48x128xbf16>, vector<128x24xbf16>, vector<48x24xf32> -> vector<48x24xf32>
    %c0_21 = arith.constant 0 : index
    %c0_22 = arith.constant 0 : index
    %27 = vector.load %arg9[%c0_21, %c0_22] : memref<1x24xf32, #tpu.memory_space<vmem>>, vector<1x24xf32>
    %28 = vector.broadcast %27 : vector<1x24xf32> to vector<48x24xf32>
    %29 = arith.addf %26, %28 : vector<48x24xf32>
    %c0_23 = arith.constant 0 : index
    %c0_24 = arith.constant 0 : index
    %30 = vector.load %arg10[%c0_23, %c0_24] : memref<48x24xf32, #tpu.memory_space<vmem>>, vector<48x24xf32>
    tpu.vector_store %arg10[%c0_23, %c0_24], %29 {strides = array<i32>} : memref<48x24xf32, #tpu.memory_space<vmem>>, vector<48x24xf32>,
    return
  }
  func.func @transform_0(%arg0: i32) -> (i32, i32) {
    %c0_i32 = arith.constant 0 : i32
    %c0_i32_0 = arith.constant 0 : i32
    return %arg0, %c0_i32 : i32, i32
  }
  func.func @transform_1(%arg0: i32) -> (i32, i32) {
    %c0_i32 = arith.constant 0 : i32
    %c0_i32_0 = arith.constant 0 : i32
    %c0_i32_1 = arith.constant 0 : i32
    return %c0_i32, %c0_i32_0 : i32, i32
  }
  func.func @transform_2(%arg0: i32) -> (i32, i32) {
    %c0_i32 = arith.constant 0 : i32
    %c0_i32_0 = arith.constant 0 : i32
    %c0_i32_1 = arith.constant 0 : i32
    return %c0_i32, %c0_i32_0 : i32, i32
  }
  func.func @transform_3(%arg0: i32) -> (i32, i32) {
    %c0_i32 = arith.constant 0 : i32
    %c0_i32_0 = arith.constant 0 : i32
    %c0_i32_1 = arith.constant 0 : i32
    return %c0_i32, %c0_i32_0 : i32, i32
  }
  func.func @transform_4(%arg0: i32) -> (i32, i32) {
    %c0_i32 = arith.constant 0 : i32
    %c0_i32_0 = arith.constant 0 : i32
    %c0_i32_1 = arith.constant 0 : i32
    return %c0_i32, %c0_i32_0 : i32, i32
  }
  func.func @transform_5(%arg0: i32) -> (i32, i32) {
    %c0_i32 = arith.constant 0 : i32
    %c0_i32_0 = arith.constant 0 : i32
    %c0_i32_1 = arith.constant 0 : i32
    return %c0_i32, %c0_i32_0 : i32, i32
  }
  func.func @transform_6(%arg0: i32) -> (i32, i32) {
    %c0_i32 = arith.constant 0 : i32
    %c0_i32_0 = arith.constant 0 : i32
    %c0_i32_1 = arith.constant 0 : i32
    return %c0_i32, %c0_i32_0 : i32, i32
  }
  func.func @transform_7(%arg0: i32) -> (i32, i32) {
    %c0_i32 = arith.constant 0 : i32
    %c0_i32_0 = arith.constant 0 : i32
    %c0_i32_1 = arith.constant 0 : i32
    return %c0_i32, %c0_i32_0 : i32, i32
  }
  func.func @transform_8(%arg0: i32) -> (i32, i32) {
    %c0_i32 = arith.constant 0 : i32
    %c0_i32_0 = arith.constant 0 : i32
    %c0_i32_1 = arith.constant 0 : i32
    return %c0_i32, %c0_i32_0 : i32, i32
  }
  func.func @transform_9(%arg0: i32) -> (i32, i32) {
    %c0_i32 = arith.constant 0 : i32
    %c0_i32_0 = arith.constant 0 : i32
    return %arg0, %c0_i32 : i32, i32
  }
}

</mosaic_0001>

<llo_original>
// kernel: basic_mlp_forward.1
$region0: #{basic_mlp_forward.1}
  #allocation0 [shape = 'u32[]', space=smem, size = 0x4, offset = 0x4, fixed_abs, tag = 'smem constant byte address 0x4 - core index']
  #allocation1 [shape = 'u32[144,128]{1,0:T(1,128)}', space=vmem, size = 0x12000, scoped, tag = 'internal scratch']
  %s0 = inlined_call_operand.vmem [shape: bf16[48,72], index: 0, kind: input, shape index: {}]
  %s1 = inlined_call_operand.hbm [shape: bf16[72,128], index: 1, kind: input, shape index: {}]
  %s2 = inlined_call_operand.vmem [shape: f32[1,128], index: 2, kind: input, shape index: {}]
  %s3 = inlined_call_operand.vmem [shape: bf16[128,128], index: 3, kind: input, shape index: {}]
  %s4 = inlined_call_operand.vmem [shape: f32[1,128], index: 4, kind: input, shape index: {}]
  %s5 = inlined_call_operand.vmem [shape: bf16[128,128], index: 5, kind: input, shape index: {}]
  %s6 = inlined_call_operand.vmem [shape: f32[1,128], index: 6, kind: input, shape index: {}]
  %s7 = inlined_call_operand.vmem [shape: bf16[128,24], index: 7, kind: input, shape index: {}]
  %s8 = inlined_call_operand.vmem [shape: f32[1,24], index: 8, kind: input, shape index: {}]
  %s9 = inlined_call_operand.hbm [shape: f32[48,24], index: 9, kind: output, shape index: {}]
  %s10 = sld [smem:[#allocation0]]
  $region50: #{basic_mlp_forward.1} parent=0
    _
  %s12 = ssub.s32 1, %s10
  %s13 = scalar_select 0, %s12, %s10
  $region1: #{basic_mlp_forward.1} parent=0
    #allocation2 [shape = 'u8[18432]{0}', space=vmem, size = 0x4800, scoped, tag = 'input window, operand 1, single buffered']
    #allocation3 [shape = 's32[1]{0}', space=sflag, size = 0x4, scoped, tag = 'scoped memory for basic_mlp_forward.1']
    #allocation4 [shape = 's32[1]{0}', space=sflag, size = 0x4, scoped, tag = 'scoped memory for basic_mlp_forward.1']
    #allocation5 [shape = 'u8[24576]{0}', space=vmem, size = 0x6000, scoped, tag = 'output window, operand 0, single buffered']
    %14 = vsyncpa [#allocation3], 0
    %15 = vsyncpa [#allocation4], 0
    // Predicated region
    $region2: #{basic_mlp_forward.1} parent=1 // pred_check
      _
    $region3: #{basic_mlp_forward.1} parent=1 // pred_check_branch
      %17 = sbr.rel (0) target = $region5
    $region4: #{basic_mlp_forward.1} parent=1 // pred_region
      _
    $region5: #{basic_mlp_forward.1} parent=1 // pred_fallthru
      _
    // Predicated region
    $region6: #{basic_mlp_forward.1} parent=1 // pred_check
      _
    $region7: #{basic_mlp_forward.1} parent=1 // pred_check_branch
      %19 = sbr.rel (0) target = $region9
    $region8: #{basic_mlp_forward.1} parent=1 // pred_region
      %s21 = ssub.s32 576, 576
      %22 = vsyncadd [#allocation3], %s21
      %s23 = sshll.u32 [#allocation2], 4
      %s24 = int_to_ptr.vmem [resolvable:$true] %s23
      %29 = dma.hbm_to_vmem [thread:$0]  %s1, 576, %s24, [#allocation3], 64, 64, 4
    $region9: #{basic_mlp_forward.1} parent=1 // pred_fallthru
      _
    // Predicated region
    $region10: #{basic_mlp_forward.1} parent=1 // pred_check
      _
    $region11: #{basic_mlp_forward.1} parent=1 // pred_check_branch
      %31 = sbr.rel (0) target = $region13
    $region12: #{basic_mlp_forward.1} parent=1 // pred_region
      _
    $region13: #{basic_mlp_forward.1} parent=1 // pred_fallthru
      _
    // Predicated region
    $region14: #{basic_mlp_forward.1} parent=1 // pred_check
      _
    $region15: #{basic_mlp_forward.1} parent=1 // pred_check_branch
      %33 = sbr.rel (0) target = $region17
    $region16: #{basic_mlp_forward.1} parent=1 // pred_region
      _
    $region17: #{basic_mlp_forward.1} parent=1 // pred_fallthru
      _
    // Predicated region
    $region18: #{basic_mlp_forward.1} parent=1 // pred_check
      _
    $region19: #{basic_mlp_forward.1} parent=1 // pred_check_branch
      %35 = sbr.rel (0) target = $region21
    $region20: #{basic_mlp_forward.1} parent=1 // pred_region
      _
    $region21: #{basic_mlp_forward.1} parent=1 // pred_fallthru
      _
    // Predicated region
    $region22: #{basic_mlp_forward.1} parent=1 // pred_check
      _
    $region23: #{basic_mlp_forward.1} parent=1 // pred_check_branch
      %37 = sbr.rel (0) target = $region25
    $region24: #{basic_mlp_forward.1} parent=1 // pred_region
      _
    $region25: #{basic_mlp_forward.1} parent=1 // pred_fallthru
      _
    // Predicated region
    $region26: #{basic_mlp_forward.1} parent=1 // pred_check
      _
    $region27: #{basic_mlp_forward.1} parent=1 // pred_check_branch
      %39 = sbr.rel (0) target = $region29
    $region28: #{basic_mlp_forward.1} parent=1 // pred_region
      _
    $region29: #{basic_mlp_forward.1} parent=1 // pred_fallthru
      _
    // Predicated region
    $region30: #{basic_mlp_forward.1} parent=1 // pred_check
      _
    $region31: #{basic_mlp_forward.1} parent=1 // pred_check_branch
      %41 = sbr.rel (0) target = $region33
    $region32: #{basic_mlp_forward.1} parent=1 // pred_region
      _
    $region33: #{basic_mlp_forward.1} parent=1 // pred_fallthru
      _
    // Predicated region
    $region34: #{basic_mlp_forward.1} parent=1 // pred_check
      _
    $region35: #{basic_mlp_forward.1} parent=1 // pred_check_branch
      %43 = sbr.rel (0) target = $region37
    $region36: #{basic_mlp_forward.1} parent=1 // pred_region
      _
    $region37: #{basic_mlp_forward.1} parent=1 // pred_fallthru
      _
    // Predicated region
    $region38: #{basic_mlp_forward.1} parent=1 // pred_check
      _
    $region39: #{basic_mlp_forward.1} parent=1 // pred_check_branch
      %45 = sbr.rel (0) target = $region41
    $region40: #{basic_mlp_forward.1} parent=1 // pred_region
      %46 = dma.done [#allocation3], 576
    $region41: #{basic_mlp_forward.1} parent=1 // pred_fallthru
      _
    %v48 = vld [vmem:[%s0] sm:$0xf]
    %v49 = vld [vmem:[%s0 + $0x4] sm:$0xf]
    %v50 = vld [vmem:[%s0 + $0x8] sm:$0xf]
    %v51 = vld [vmem:[%s0 + $0xc] sm:$0xf]
    %v52 = vld [vmem:[%s0 + $0x10] sm:$0xf]
    %v53 = vld [vmem:[%s0 + $0x14] sm:$0xf]
    %v54 = vld [vmem:[#allocation2] sm:$0xf]
    %v55 = vld [vmem:[#allocation2 + $0x4] sm:$0xf]
    %v56 = vld [vmem:[#allocation2 + $0x8] sm:$0xf]
    %v57 = vld [vmem:[#allocation2 + $0xc] sm:$0xf]
    %v58 = vld [vmem:[#allocation2 + $0x10] sm:$0xf]
    %v59 = vld [vmem:[#allocation2 + $0x14] sm:$0xf]
    %v60 = vld [vmem:[#allocation2 + $0x18] sm:$0xf]
    %v61 = vld [vmem:[#allocation2 + $0x1c] sm:$0xf]
    %v62 = vld [vmem:[#allocation2 + $0x20] sm:$0xf]
    %v63 = vld [vmem:[%s2] sm:$0x1]
    %v65 = vlaneseq
    %v66 = vshrl.u32 %v65, 7
    %v67 = vsub.s32 0, %v66
    %v68 = vrot.slane %v63, %v67
    %v76 = vunpack.c.l.b16 %v48
    %v77 = vunpack.c.l.b16 %v49
    %v78 = vunpack.c.l.b16 %v50
    %v79 = vunpack.c.l.b16 %v51
    %v80 = vunpack.c.l.b16 %v52
    %v81 = vunpack.c.l.b16 %v53
    %v82 = vpack.c.b16 %v77, %v76
    %v83 = vpack.c.b16 %v79, %v78
    %v84 = vpack.c.b16 %v81, %v80
    %v94 = vunpack.c.l.b16 %v54
    %v95 = vunpack.c.l.b16 %v55
    %v96 = vunpack.c.l.b16 %v56
    %v97 = vunpack.c.l.b16 %v57
    %v98 = vunpack.c.l.b16 %v58
    %v99 = vunpack.c.l.b16 %v59
    %v100 = vunpack.c.l.b16 %v60
    %v101 = vunpack.c.l.b16 %v61
    %v102 = vunpack.c.l.b16 %v62
    %v103 = vpack.c.b16 %v95, %v94
    %v104 = vpack.c.b16 %v97, %v96
    %v105 = vpack.c.b16 %v99, %v98
    %v106 = vpack.c.b16 %v101, %v100
    %v107 = vpack.c.b16 %v102, %v102
    %vm112 = vcmask 588800
    %v114 = vsel %vm112, %v82, 0
    %v117 = vsel %vm112, %v83, 0
    %v120 = vsel %vm112, %v84, 0
    %vm122 = vcmask 1043456
    %v124 = vsel %vm122, %v107, 0
    %126 = vmatprep.subr.bf16.mxu0 0
    %127 = vmatpush1.bf16.msra.mxu0 %v103
    %128 = vmatprep.subr.bf16.mxu0 0
    %129 = vmatpush1.bf16.msra.mxu0 %v104
    %130 = vmatprep.subr.bf16.mxu0 0
    %131 = vmatpush1.bf16.msra.mxu0 %v105
    %132 = vmatprep.subr.bf16.mxu0 0
    %133 = vmatpush1.bf16.msra.mxu0 %v106
    %134 = vmatprep.subr.bf16.mxu0 0
    %135 = vmatpush1.bf16.msra.mxu0 %v124
    %136 = vmatprep.subr.bf16.mxu0 0
    %137 = vmatpush1.bf16.msra.mxu0 0
    %138 = vmatprep.subr.bf16.mxu0 0
    %139 = vmatpush1.bf16.msra.mxu0 0
    %140 = vmatprep.subr.bf16.mxu0 0
    %141 = vmatpush1.bf16.msra.mxu0 0
    %142 = vmatprep.subr.bf16.mxu0 0
    %143 = vmatpush1.bf16.msra.mxu0 0
    %144 = vmatprep.subr.bf16.mxu0 0
    %145 = vmatpush1.bf16.msra.mxu0 0
    %146 = vmatprep.subr.bf16.mxu0 0
    %147 = vmatpush1.bf16.msra.mxu0 0
    %148 = vmatprep.subr.bf16.mxu0 0
    %149 = vmatpush1.bf16.msra.mxu0 0
    %150 = vmatprep.subr.bf16.mxu0 0
    %151 = vmatpush1.bf16.msra.mxu0 0
    %152 = vmatprep.subr.bf16.mxu0 0
    %153 = vmatpush1.bf16.msra.mxu0 0
    %154 = vmatprep.subr.bf16.mxu0 0
    %155 = vmatpush1.bf16.msra.mxu0 0
    %156 = vmatprep.subr.bf16.mxu0 0
    %157 = vmatpush1.bf16.msra.mxu0 0
    %158 = vmatprep.mubr.bf16.mxu0 0
    %159 = vmatmul.mubr.bf16.gmra.mrb[0].mxu0 %v114
    %v160 = vpop.f32.mrb[0].mxu0
    %v161 = vadd.f32 %v68, %v160
    %v162 = vpop.f32.mrb[0].mxu0
    %v163 = vpop.f32.mrb[0].mxu0
    %v164 = vadd.f32 %v68, %v163
    %v165 = vpop.f32.mrb[0].mxu0
    %166 = vmatprep.mubr.bf16.mxu0 0
    %167 = vmatmul.mubr.bf16.gmra.mrb[0].mxu0 %v117
    %v168 = vpop.f32.mrb[0].mxu0
    %v169 = vadd.f32 %v68, %v168
    %v170 = vpop.f32.mrb[0].mxu0
    %v171 = vpop.f32.mrb[0].mxu0
    %v172 = vadd.f32 %v68, %v171
    %v173 = vpop.f32.mrb[0].mxu0
    %174 = vmatprep.mubr.bf16.mxu0 0
    %175 = vmatmul.mubr.bf16.gmra.mrb[0].mxu0 %v120
    %v176 = vpop.f32.mrb[0].mxu0
    %v177 = vadd.f32 %v68, %v176
    %v178 = vpop.f32.mrb[0].mxu0
    %v179 = vpop.f32.mrb[0].mxu0
    %v180 = vadd.f32 %v68, %v179
    %v181 = vpop.f32.mrb[0].mxu0
    %182 = vdwg.mxu0
    %v183 = vmax.f32 %v161, 0.0
    %v184 = vmax.f32 %v164, 0.0
    %v185 = vmax.f32 %v169, 0.0
    %v186 = vmax.f32 %v172, 0.0
    %v187 = vmax.f32 %v177, 0.0
    %v188 = vmax.f32 %v180, 0.0
    %v189 = vpack.c.bf16 %v184, %v183
    %v190 = vpack.c.bf16 %v186, %v185
    %v191 = vpack.c.bf16 %v188, %v187
    %v192 = vld [vmem:[%s3] sm:$0xf]
    %v193 = vld [vmem:[%s3 + $0x4] sm:$0xf]
    %v194 = vld [vmem:[%s3 + $0x8] sm:$0xf]
    %v195 = vld [vmem:[%s3 + $0xc] sm:$0xf]
    %v196 = vld [vmem:[%s3 + $0x10] sm:$0xf]
    %v197 = vld [vmem:[%s3 + $0x14] sm:$0xf]
    %v198 = vld [vmem:[%s3 + $0x18] sm:$0xf]
    %v199 = vld [vmem:[%s3 + $0x1c] sm:$0xf]
    %v200 = vld [vmem:[%s3 + $0x20] sm:$0xf]
    %v201 = vld [vmem:[%s3 + $0x24] sm:$0xf]
    %v202 = vld [vmem:[%s3 + $0x28] sm:$0xf]
    %v203 = vld [vmem:[%s3 + $0x2c] sm:$0xf]
    %v204 = vld [vmem:[%s3 + $0x30] sm:$0xf]
    %v205 = vld [vmem:[%s3 + $0x34] sm:$0xf]
    %v206 = vld [vmem:[%s3 + $0x38] sm:$0xf]
    %v207 = vld [vmem:[%s3 + $0x3c] sm:$0xf]
    %v208 = vld [vmem:[%s4] sm:$0x1]
    %v210 = vlaneseq
    %v211 = vshrl.u32 %v210, 7
    %v212 = vsub.s32 0, %v211
    %v213 = vrot.slane %v208, %v212
    %v231 = vunpack.c.l.b16 %v192
    %v232 = vunpack.c.l.b16 %v193
    %v233 = vunpack.c.l.b16 %v194
    %v234 = vunpack.c.l.b16 %v195
    %v235 = vunpack.c.l.b16 %v196
    %v236 = vunpack.c.l.b16 %v197
    %v237 = vunpack.c.l.b16 %v198
    %v238 = vunpack.c.l.b16 %v199
    %v239 = vunpack.c.l.b16 %v200
    %v240 = vunpack.c.l.b16 %v201
    %v241 = vunpack.c.l.b16 %v202
    %v242 = vunpack.c.l.b16 %v203
    %v243 = vunpack.c.l.b16 %v204
    %v244 = vunpack.c.l.b16 %v205
    %v245 = vunpack.c.l.b16 %v206
    %v246 = vunpack.c.l.b16 %v207
    %v247 = vpack.c.b16 %v232, %v231
    %v248 = vpack.c.b16 %v234, %v233
    %v249 = vpack.c.b16 %v236, %v235
    %v250 = vpack.c.b16 %v238, %v237
    %v251 = vpack.c.b16 %v240, %v239
    %v252 = vpack.c.b16 %v242, %v241
    %v253 = vpack.c.b16 %v244, %v243
    %v254 = vpack.c.b16 %v246, %v245
    %263 = vmatprep.subr.bf16.mxu0 0
    %264 = vmatpush1.bf16.msra.mxu0 %v247
    %265 = vmatprep.subr.bf16.mxu0 0
    %266 = vmatpush1.bf16.msra.mxu0 %v248
    %267 = vmatprep.subr.bf16.mxu0 0
    %268 = vmatpush1.bf16.msra.mxu0 %v249
    %269 = vmatprep.subr.bf16.mxu0 0
    %270 = vmatpush1.bf16.msra.mxu0 %v250
    %271 = vmatprep.subr.bf16.mxu0 0
    %272 = vmatpush1.bf16.msra.mxu0 %v251
    %273 = vmatprep.subr.bf16.mxu0 0
    %274 = vmatpush1.bf16.msra.mxu0 %v252
    %275 = vmatprep.subr.bf16.mxu0 0
    %276 = vmatpush1.bf16.msra.mxu0 %v253
    %277 = vmatprep.subr.bf16.mxu0 0
    %278 = vmatpush1.bf16.msra.mxu0 %v254
    %279 = vmatprep.subr.bf16.mxu0 0
    %280 = vmatpush1.bf16.msra.mxu0 0
    %281 = vmatprep.subr.bf16.mxu0 0
    %282 = vmatpush1.bf16.msra.mxu0 0
    %283 = vmatprep.subr.bf16.mxu0 0
    %284 = vmatpush1.bf16.msra.mxu0 0
    %285 = vmatprep.subr.bf16.mxu0 0
    %286 = vmatpush1.bf16.msra.mxu0 0
    %287 = vmatprep.subr.bf16.mxu0 0
    %288 = vmatpush1.bf16.msra.mxu0 0
    %289 = vmatprep.subr.bf16.mxu0 0
    %290 = vmatpush1.bf16.msra.mxu0 0
    %291 = vmatprep.subr.bf16.mxu0 0
    %292 = vmatpush1.bf16.msra.mxu0 0
    %293 = vmatprep.subr.bf16.mxu0 0
    %294 = vmatpush1.bf16.msra.mxu0 0
    %295 = vmatprep.mubr.bf16.mxu0 0
    %296 = vmatmul.mubr.bf16.gmra.mrb[0].mxu0 %v189
    %v297 = vpop.f32.mrb[0].mxu0
    %v298 = vadd.f32 %v213, %v297
    %v299 = vpop.f32.mrb[0].mxu0
    %v300 = vpop.f32.mrb[0].mxu0
    %v301 = vadd.f32 %v213, %v300
    %v302 = vpop.f32.mrb[0].mxu0
    %303 = vmatprep.mubr.bf16.mxu0 0
    %304 = vmatmul.mubr.bf16.gmra.mrb[0].mxu0 %v190
    %v305 = vpop.f32.mrb[0].mxu0
    %v306 = vadd.f32 %v213, %v305
    %v307 = vpop.f32.mrb[0].mxu0
    %v308 = vpop.f32.mrb[0].mxu0
    %v309 = vadd.f32 %v213, %v308
    %v310 = vpop.f32.mrb[0].mxu0
    %311 = vmatprep.mubr.bf16.mxu0 0
    %312 = vmatmul.mubr.bf16.gmra.mrb[0].mxu0 %v191
    %v313 = vpop.f32.mrb[0].mxu0
    %v314 = vadd.f32 %v213, %v313
    %v315 = vpop.f32.mrb[0].mxu0
    %v316 = vpop.f32.mrb[0].mxu0
    %v317 = vadd.f32 %v213, %v316
    %v318 = vpop.f32.mrb[0].mxu0
    %319 = vdwg.mxu0
    %v320 = vmax.f32 %v298, 0.0
    %v321 = vmax.f32 %v301, 0.0
    %v322 = vmax.f32 %v306, 0.0
    %v323 = vmax.f32 %v309, 0.0
    %v324 = vmax.f32 %v314, 0.0
    %v325 = vmax.f32 %v317, 0.0
    %v326 = vpack.c.bf16 %v321, %v320
    %v327 = vpack.c.bf16 %v323, %v322
    %v328 = vpack.c.bf16 %v325, %v324
    %v329 = vld [vmem:[%s5] sm:$0xf]
    %v330 = vld [vmem:[%s5 + $0x4] sm:$0xf]
    %v331 = vld [vmem:[%s5 + $0x8] sm:$0xf]
    %v332 = vld [vmem:[%s5 + $0xc] sm:$0xf]
    %v333 = vld [vmem:[%s5 + $0x10] sm:$0xf]
    %v334 = vld [vmem:[%s5 + $0x14] sm:$0xf]
    %v335 = vld [vmem:[%s5 + $0x18] sm:$0xf]
    %v336 = vld [vmem:[%s5 + $0x1c] sm:$0xf]
    %v337 = vld [vmem:[%s5 + $0x20] sm:$0xf]
    %v338 = vld [vmem:[%s5 + $0x24] sm:$0xf]
    %v339 = vld [vmem:[%s5 + $0x28] sm:$0xf]
    %v340 = vld [vmem:[%s5 + $0x2c] sm:$0xf]
    %v341 = vld [vmem:[%s5 + $0x30] sm:$0xf]
    %v342 = vld [vmem:[%s5 + $0x34] sm:$0xf]
    %v343 = vld [vmem:[%s5 + $0x38] sm:$0xf]
    %v344 = vld [vmem:[%s5 + $0x3c] sm:$0xf]
    %v345 = vld [vmem:[%s6] sm:$0x1]
    %v347 = vlaneseq
    %v348 = vshrl.u32 %v347, 7
    %v349 = vsub.s32 0, %v348
    %v350 = vrot.slane %v345, %v349
    %v368 = vunpack.c.l.b16 %v329
    %v369 = vunpack.c.l.b16 %v330
    %v370 = vunpack.c.l.b16 %v331
    %v371 = vunpack.c.l.b16 %v332
    %v372 = vunpack.c.l.b16 %v333
    %v373 = vunpack.c.l.b16 %v334
    %v374 = vunpack.c.l.b16 %v335
    %v375 = vunpack.c.l.b16 %v336
    %v376 = vunpack.c.l.b16 %v337
    %v377 = vunpack.c.l.b16 %v338
    %v378 = vunpack.c.l.b16 %v339
    %v379 = vunpack.c.l.b16 %v340
    %v380 = vunpack.c.l.b16 %v341
    %v381 = vunpack.c.l.b16 %v342
    %v382 = vunpack.c.l.b16 %v343
    %v383 = vunpack.c.l.b16 %v344
    %v384 = vpack.c.b16 %v369, %v368
    %v385 = vpack.c.b16 %v371, %v370
    %v386 = vpack.c.b16 %v373, %v372
    %v387 = vpack.c.b16 %v375, %v374
    %v388 = vpack.c.b16 %v377, %v376
    %v389 = vpack.c.b16 %v379, %v378
    %v390 = vpack.c.b16 %v381, %v380
    %v391 = vpack.c.b16 %v383, %v382
    %400 = vmatprep.subr.bf16.mxu0 0
    %401 = vmatpush1.bf16.msra.mxu0 %v384
    %402 = vmatprep.subr.bf16.mxu0 0
    %403 = vmatpush1.bf16.msra.mxu0 %v385
    %404 = vmatprep.subr.bf16.mxu0 0
    %405 = vmatpush1.bf16.msra.mxu0 %v386
    %406 = vmatprep.subr.bf16.mxu0 0
    %407 = vmatpush1.bf16.msra.mxu0 %v387
    %408 = vmatprep.subr.bf16.mxu0 0
    %409 = vmatpush1.bf16.msra.mxu0 %v388
    %410 = vmatprep.subr.bf16.mxu0 0
    %411 = vmatpush1.bf16.msra.mxu0 %v389
    %412 = vmatprep.subr.bf16.mxu0 0
    %413 = vmatpush1.bf16.msra.mxu0 %v390
    %414 = vmatprep.subr.bf16.mxu0 0
    %415 = vmatpush1.bf16.msra.mxu0 %v391
    %416 = vmatprep.subr.bf16.mxu0 0
    %417 = vmatpush1.bf16.msra.mxu0 0
    %418 = vmatprep.subr.bf16.mxu0 0
    %419 = vmatpush1.bf16.msra.mxu0 0
    %420 = vmatprep.subr.bf16.mxu0 0
    %421 = vmatpush1.bf16.msra.mxu0 0
    %422 = vmatprep.subr.bf16.mxu0 0
    %423 = vmatpush1.bf16.msra.mxu0 0
    %424 = vmatprep.subr.bf16.mxu0 0
    %425 = vmatpush1.bf16.msra.mxu0 0
    %426 = vmatprep.subr.bf16.mxu0 0
    %427 = vmatpush1.bf16.msra.mxu0 0
    %428 = vmatprep.subr.bf16.mxu0 0
    %429 = vmatpush1.bf16.msra.mxu0 0
    %430 = vmatprep.subr.bf16.mxu0 0
    %431 = vmatpush1.bf16.msra.mxu0 0
    %432 = vmatprep.mubr.bf16.mxu0 0
    %433 = vmatmul.mubr.bf16.gmra.mrb[0].mxu0 %v326
    %v434 = vpop.f32.mrb[0].mxu0
    %v435 = vadd.f32 %v350, %v434
    %v436 = vpop.f32.mrb[0].mxu0
    %v437 = vpop.f32.mrb[0].mxu0
    %v438 = vadd.f32 %v350, %v437
    %v439 = vpop.f32.mrb[0].mxu0
    %440 = vmatprep.mubr.bf16.mxu0 0
    %441 = vmatmul.mubr.bf16.gmra.mrb[0].mxu0 %v327
    %v442 = vpop.f32.mrb[0].mxu0
    %v443 = vadd.f32 %v350, %v442
    %v444 = vpop.f32.mrb[0].mxu0
    %v445 = vpop.f32.mrb[0].mxu0
    %v446 = vadd.f32 %v350, %v445
    %v447 = vpop.f32.mrb[0].mxu0
    %448 = vmatprep.mubr.bf16.mxu0 0
    %449 = vmatmul.mubr.bf16.gmra.mrb[0].mxu0 %v328
    %v450 = vpop.f32.mrb[0].mxu0
    %v451 = vadd.f32 %v350, %v450
    %v452 = vpop.f32.mrb[0].mxu0
    %v453 = vpop.f32.mrb[0].mxu0
    %v454 = vadd.f32 %v350, %v453
    %v455 = vpop.f32.mrb[0].mxu0
    %456 = vdwg.mxu0
    %v457 = vmax.f32 %v435, 0.0
    %v458 = vmax.f32 %v438, 0.0
    %v459 = vmax.f32 %v443, 0.0
    %v460 = vmax.f32 %v446, 0.0
    %v461 = vmax.f32 %v451, 0.0
    %v462 = vmax.f32 %v454, 0.0
    %v463 = vpack.c.bf16 %v458, %v457
    %v464 = vpack.c.bf16 %v460, %v459
    %v465 = vpack.c.bf16 %v462, %v461
    %v466 = vld [vmem:[%s7] sm:$0xf]
    %v467 = vld [vmem:[%s7 + $0x4] sm:$0xf]
    %v468 = vld [vmem:[%s7 + $0x8] sm:$0xf]
    %v469 = vld [vmem:[%s7 + $0xc] sm:$0xf]
    %v470 = vld [vmem:[%s7 + $0x10] sm:$0xf]
    %v471 = vld [vmem:[%s7 + $0x14] sm:$0xf]
    %v472 = vld [vmem:[%s7 + $0x18] sm:$0xf]
    %v473 = vld [vmem:[%s7 + $0x1c] sm:$0xf]
    %v474 = vld [vmem:[%s7 + $0x20] sm:$0xf]
    %v475 = vld [vmem:[%s7 + $0x24] sm:$0xf]
    %v476 = vld [vmem:[%s7 + $0x28] sm:$0xf]
    %v477 = vld [vmem:[%s7 + $0x2c] sm:$0xf]
    %v478 = vld [vmem:[%s7 + $0x30] sm:$0xf]
    %v479 = vld [vmem:[%s7 + $0x34] sm:$0xf]
    %v480 = vld [vmem:[%s7 + $0x38] sm:$0xf]
    %v481 = vld [vmem:[%s7 + $0x3c] sm:$0xf]
    %v482 = vld [vmem:[%s8] sm:$0x1]
    %v484 = vlaneseq
    %v485 = vshrl.u32 %v484, 7
    %v486 = vsub.s32 0, %v485
    %v487 = vrot.slane %v482, %v486
    %v505 = vunpack.c.l.b16 %v466
    %v506 = vunpack.c.l.b16 %v467
    %v507 = vunpack.c.l.b16 %v468
    %v508 = vunpack.c.l.b16 %v469
    %v509 = vunpack.c.l.b16 %v470
    %v510 = vunpack.c.l.b16 %v471
    %v511 = vunpack.c.l.b16 %v472
    %v512 = vunpack.c.l.b16 %v473
    %v513 = vunpack.c.l.b16 %v474
    %v514 = vunpack.c.l.b16 %v475
    %v515 = vunpack.c.l.b16 %v476
    %v516 = vunpack.c.l.b16 %v477
    %v517 = vunpack.c.l.b16 %v478
    %v518 = vunpack.c.l.b16 %v479
    %v519 = vunpack.c.l.b16 %v480
    %v520 = vunpack.c.l.b16 %v481
    %v521 = vpack.c.b16 %v506, %v505
    %v522 = vpack.c.b16 %v508, %v507
    %v523 = vpack.c.b16 %v510, %v509
    %v524 = vpack.c.b16 %v512, %v511
    %v525 = vpack.c.b16 %v514, %v513
    %v526 = vpack.c.b16 %v516, %v515
    %v527 = vpack.c.b16 %v518, %v517
    %v528 = vpack.c.b16 %v520, %v519
    %537 = vmatprep.subr.bf16.mxu0 0
    %538 = vmatpush1.bf16.msra.mxu0 %v521
    %539 = vmatprep.subr.bf16.mxu0 0
    %540 = vmatpush1.bf16.msra.mxu0 %v522
    %541 = vmatprep.subr.bf16.mxu0 0
    %542 = vmatpush1.bf16.msra.mxu0 %v523
    %543 = vmatprep.subr.bf16.mxu0 0
    %544 = vmatpush1.bf16.msra.mxu0 %v524
    %545 = vmatprep.subr.bf16.mxu0 0
    %546 = vmatpush1.bf16.msra.mxu0 %v525
    %547 = vmatprep.subr.bf16.mxu0 0
    %548 = vmatpush1.bf16.msra.mxu0 %v526
    %549 = vmatprep.subr.bf16.mxu0 0
    %550 = vmatpush1.bf16.msra.mxu0 %v527
    %551 = vmatprep.subr.bf16.mxu0 0
    %552 = vmatpush1.bf16.msra.mxu0 %v528
    %553 = vmatprep.subr.bf16.mxu0 0
    %554 = vmatpush1.bf16.msra.mxu0 0
    %555 = vmatprep.subr.bf16.mxu0 0
    %556 = vmatpush1.bf16.msra.mxu0 0
    %557 = vmatprep.subr.bf16.mxu0 0
    %558 = vmatpush1.bf16.msra.mxu0 0
    %559 = vmatprep.subr.bf16.mxu0 0
    %560 = vmatpush1.bf16.msra.mxu0 0
    %561 = vmatprep.subr.bf16.mxu0 0
    %562 = vmatpush1.bf16.msra.mxu0 0
    %563 = vmatprep.subr.bf16.mxu0 0
    %564 = vmatpush1.bf16.msra.mxu0 0
    %565 = vmatprep.subr.bf16.mxu0 0
    %566 = vmatpush1.bf16.msra.mxu0 0
    %567 = vmatprep.subr.bf16.mxu0 0
    %568 = vmatpush1.bf16.msra.mxu0 0
    %569 = vmatprep.mubr.bf16.mxu0 0
    %570 = vmatmul.mubr.bf16.gmra.mrb[0].mxu0 %v463
    %v571 = vpop.f32.mrb[0].mxu0
    %v572 = vadd.f32 %v487, %v571
    %v573 = vpop.f32.mrb[0].mxu0
    %v574 = vpop.f32.mrb[0].mxu0
    %v575 = vadd.f32 %v487, %v574
    %v576 = vpop.f32.mrb[0].mxu0
    %577 = vmatprep.mubr.bf16.mxu0 0
    %578 = vmatmul.mubr.bf16.gmra.mrb[0].mxu0 %v464
    %v579 = vpop.f32.mrb[0].mxu0
    %v580 = vadd.f32 %v487, %v579
    %v581 = vpop.f32.mrb[0].mxu0
    %v582 = vpop.f32.mrb[0].mxu0
    %v583 = vadd.f32 %v487, %v582
    %v584 = vpop.f32.mrb[0].mxu0
    %585 = vmatprep.mubr.bf16.mxu0 0
    %586 = vmatmul.mubr.bf16.gmra.mrb[0].mxu0 %v465
    %v587 = vpop.f32.mrb[0].mxu0
    %v588 = vadd.f32 %v487, %v587
    %v589 = vpop.f32.mrb[0].mxu0
    %v590 = vpop.f32.mrb[0].mxu0
    %v591 = vadd.f32 %v487, %v590
    %v592 = vpop.f32.mrb[0].mxu0
    %593 = vdwg.mxu0
    %vm594 = vcmask 195584
    %595 = vst.msk [vmem:[#allocation5] sm:$0xff] %vm594, %v572
    %596 = vst.msk [vmem:[#allocation5 + $0x8] sm:$0xff] %vm594, %v575
    %597 = vst.msk [vmem:[#allocation5 + $0x10] sm:$0xff] %vm594, %v580
    %598 = vst.msk [vmem:[#allocation5 + $0x18] sm:$0xff] %vm594, %v583
    %599 = vst.msk [vmem:[#allocation5 + $0x20] sm:$0xff] %vm594, %v588
    %600 = vst.msk [vmem:[#allocation5 + $0x28] sm:$0xff] %vm594, %v591
    // Predicated region
    $region42: #{basic_mlp_forward.1} parent=1 // pred_check
      _
    $region43: #{basic_mlp_forward.1} parent=1 // pred_check_branch
      %602 = sbr.rel (0) target = $region45
    $region44: #{basic_mlp_forward.1} parent=1 // pred_region
      %s604 = ssub.s32 768, 768
      %605 = vsyncadd [#allocation4], %s604
      %s606 = sshll.u32 [#allocation5], 4
      %s607 = int_to_ptr.vmem [resolvable:$true] %s606
      %612 = dma.vmem_to_hbm [thread:$0]  %s607, 768, %s9, [#allocation4], 128, 128, 8
    $region45: #{basic_mlp_forward.1} parent=1 // pred_fallthru
      _
    // Predicated region
    $region46: #{basic_mlp_forward.1} parent=1 // pred_check
      _
    $region47: #{basic_mlp_forward.1} parent=1 // pred_check_branch
      %614 = sbr.rel (0) target = $region49
    $region48: #{basic_mlp_forward.1} parent=1 // pred_region
      %615 = dma.done [#allocation4], 768
    $region49: #{basic_mlp_forward.1} parent=1 // pred_fallthru
      _
    %616 = vsyncpa [#allocation3], 1
    %617 = vsyncpa [#allocation4], 1

</llo_original>
